<compile_context>
chip_gen: v7x
topology: tpu7x:2x2x1
jax: 0.10.0
libtpu: 0.0.40
codegen_flags: <defaults>
</compile_context>

<pallas_src>
import functools

import jax
import jax.numpy as jnp
from jax.experimental import pallas as pl
from jax.experimental.pallas import tpu as pltpu


def _vmem_limit_bytes():
    # ~100 MiB on v5e/v6e (128 MiB physical), ~48 MiB on v7x (64 MiB physical).
    try:
        cap = pltpu.get_tpu_info().vmem_capacity_bytes
    except Exception:
        cap = 64 << 20
    return int(min(cap - (16 << 20), 100 << 20))


def _pick_tile(n, candidates=(512, 256, 128)):
    for c in candidates:
        if n % c == 0:
            return c
    return n


def _pick_q_tile(n, nk, c, budget=6 << 20):
    # Prefer large query tiles (amortize per-step pipeline overhead) but cap by
    # a rough per-step live-bytes budget (f32 scores + f32/bf16 q + out) so the
    # sr_ratio==1 / large-Nk case stays comfortably inside v7x's 64 MiB VMEM.
    for cand in (512, 448, 256, 224, 128, 112, 64, 56, 32, 16, 8):
        if n % cand == 0 and (cand * nk * 4 + cand * c * 12) <= budget:
            return cand
    return n


# ----------------------------------------------------------------------------
# Kernel 1a: stride-sr conv (patch matmul) + LayerNorm + k/v projection
# ----------------------------------------------------------------------------
def _sr_kv_kernel(p_ref, wsr_ref, bsr_ref, g_ref, beta_ref, wk_ref, wv_ref,
                  k_ref, v_ref):
    # p_ref: (1, TNk, P) bf16 patches; wsr: (P, C) bf16; bias/LN params (1, C) f32
    y = jnp.dot(p_ref[0], wsr_ref[...], preferred_element_type=jnp.float32)
    y = y + bsr_ref[...]
    mean = jnp.mean(y, axis=-1, keepdims=True)
    var = jnp.mean(jnp.square(y - mean), axis=-1, keepdims=True)
    y = (y - mean) * jax.lax.rsqrt(var + 1e-5)
    y = (y * g_ref[...] + beta_ref[...]).astype(k_ref.dtype)       # (TNk, C)
    # Full-width k / v projections, computed once per (batch, kv tile).
    k_ref[0] = jnp.dot(y, wk_ref[...],
                       preferred_element_type=jnp.float32).astype(k_ref.dtype)
    v_ref[0] = jnp.dot(y, wv_ref[...],
                       preferred_element_type=jnp.float32).astype(v_ref.dtype)


# ----------------------------------------------------------------------------
# Kernel 1b: plain k/v projection (sr_ratio == 1 path)
# ----------------------------------------------------------------------------
def _kv_kernel(x_ref, wk_ref, wv_ref, k_ref, v_ref):
    xx = x_ref[0]                                                   # (TN, C) bf16
    k_ref[0] = jnp.dot(xx, wk_ref[...],
                       preferred_element_type=jnp.float32).astype(k_ref.dtype)
    v_ref[0] = jnp.dot(xx, wv_ref[...],
                       preferred_element_type=jnp.float32).astype(v_ref.dtype)


# ----------------------------------------------------------------------------
# Kernel 2: fused attention (full-width q proj, per-head softmax, full-width
#           output projection)
# ----------------------------------------------------------------------------
def _attn_kernel(x_ref, k_ref, v_ref, wq_ref, wp_ref, bp_ref, o_ref, *, num_heads):
    cd = x_ref.dtype
    x = x_ref[0]                                                    # (TQ, C)
    k = k_ref[0]                                                    # (Nk, C)
    v = v_ref[0]                                                    # (Nk, C)
    C = x.shape[-1]
    d = C // num_heads

    # Full-width q projection (softmax scale already folded into wq).
    q = jnp.dot(x, wq_ref[...], preferred_element_type=jnp.float32).astype(cd)

    outs = []
    for h in range(num_heads):
        lo = h * d
        qh = q[:, lo:lo + d]                                        # (TQ, d)
        kh = k[:, lo:lo + d]                                        # (Nk, d)
        vh = v[:, lo:lo + d]                                        # (Nk, d)
        # s = qh @ kh^T ("NT" matmul), f32 accumulation.
        s = jax.lax.dot_general(qh, kh, (((1,), (1,)), ((), ())),
                                preferred_element_type=jnp.float32)  # (TQ, Nk)
        m = jnp.max(s, axis=-1, keepdims=True)
        p = jnp.exp(s - m)
        l = jnp.sum(p, axis=-1, keepdims=True)
        oh = jnp.dot(p.astype(cd), vh, preferred_element_type=jnp.float32)
        outs.append((oh * pl.reciprocal(l, approx=True)).astype(cd))
        # TODO(synk): for very large Nk (sr_ratio==1, huge images) tile Nk
        # flash-style with an online softmax instead of materializing (TQ, Nk).

    # Lane-dense relayout of the per-head results, then one (TQ,C)x(C,C) proj.
    o = jnp.concatenate(outs, axis=-1)                              # (TQ, C)
    out = jnp.dot(o, wp_ref[...], preferred_element_type=jnp.float32) + bp_ref[...]
    o_ref[0] = out.astype(o_ref.dtype)
    # TODO(synk): attn_drop / proj_drop are identity at p=0.0 (eval mode).


# ----------------------------------------------------------------------------
# Wrapper
# ----------------------------------------------------------------------------
def gsa_attention(x, H, W, params, *, num_heads, sr_ratio,
                  compute_dtype=jnp.bfloat16, out_dtype=None):
    B, N, C = x.shape
    assert C % num_heads == 0
    d = C // num_heads
    scale = d ** -0.5
    out_dtype = x.dtype if out_dtype is None else out_dtype
    vmem = _vmem_limit_bytes()

    # One cast of the activation; everything downstream streams bf16.
    x_cd = x.astype(compute_dtype)

    # Full-width, lane-dense weights (no per-head weight splitting).
    wq = (params["q_w"] * scale).astype(compute_dtype)              # (C, C)
    wk = params["kv_w"][:, :C].astype(compute_dtype)                # (C, C)
    wv = params["kv_w"][:, C:].astype(compute_dtype)                # (C, C)
    wp = params["proj_w"].astype(compute_dtype)                     # (C, C)
    bp = params["proj_b"].reshape(1, C).astype(jnp.float32)

    if sr_ratio > 1:
        Hk, Wk = H // sr_ratio, W // sr_ratio
        Nk = Hk * Wk
        P = C * sr_ratio * sr_ratio
        # NHWC non-overlapping patch extraction (conv k=s=sr), done on the bf16
        # copy so the materialized intermediate is half the bytes.
        # TODO(synk): move the (sr, Wk) axis swap in-kernel to drop this HBM
        # pass entirely (needs an in-kernel (Hk,Wk)->(Hk*Wk) row merge).
        patches = x_cd.reshape(B, Hk, sr_ratio, Wk, sr_ratio, C)
        patches = patches.transpose(0, 1, 3, 2, 4, 5).reshape(B, Nk, P)
        # conv weight (oc, ic, kh, kw) -> rows in (kh, kw, ic) order, cols = oc
        w_sr = params["sr_w"].transpose(2, 3, 1, 0).reshape(P, C).astype(compute_dtype)
        b_sr = params["sr_b"].reshape(1, C).astype(jnp.float32)
        gamma = params["ln_g"].reshape(1, C).astype(jnp.float32)
        beta = params["ln_b"].reshape(1, C).astype(jnp.float32)

        tnk = _pick_tile(Nk)
        k_all, v_all = pl.pallas_call(
            _sr_kv_kernel,
            out_shape=(jax.ShapeDtypeStruct((B, Nk, C), compute_dtype),
                       jax.ShapeDtypeStruct((B, Nk, C), compute_dtype)),
            grid_spec=pltpu.PrefetchScalarGridSpec(
                num_scalar_prefetch=0,
                grid=(B, Nk // tnk),
                in_specs=[
                    pl.BlockSpec((1, tnk, P), lambda b, t: (b, t, 0)),
                    pl.BlockSpec((P, C), lambda b, t: (0, 0)),
                    pl.BlockSpec((1, C), lambda b, t: (0, 0)),
                    pl.BlockSpec((1, C), lambda b, t: (0, 0)),
                    pl.BlockSpec((1, C), lambda b, t: (0, 0)),
                    pl.BlockSpec((C, C), lambda b, t: (0, 0)),
                    pl.BlockSpec((C, C), lambda b, t: (0, 0)),
                ],
                out_specs=[pl.BlockSpec((1, tnk, C), lambda b, t: (b, t, 0)),
                           pl.BlockSpec((1, tnk, C), lambda b, t: (b, t, 0))],
            ),
            compiler_params=pltpu.CompilerParams(
                dimension_semantics=("parallel", "parallel"),
                vmem_limit_bytes=vmem),
        )(patches, w_sr, b_sr, gamma, beta, wk, wv)
    else:
        Nk = N
        tn = _pick_tile(N)
        k_all, v_all = pl.pallas_call(
            _kv_kernel,
            out_shape=(jax.ShapeDtypeStruct((B, Nk, C), compute_dtype),
                       jax.ShapeDtypeStruct((B, Nk, C), compute_dtype)),
            grid_spec=pltpu.PrefetchScalarGridSpec(
                num_scalar_prefetch=0,
                grid=(B, N // tn),
                in_specs=[
                    pl.BlockSpec((1, tn, C), lambda b, t: (b, t, 0)),
                    pl.BlockSpec((C, C), lambda b, t: (0, 0)),
                    pl.BlockSpec((C, C), lambda b, t: (0, 0)),
                ],
                out_specs=[pl.BlockSpec((1, tn, C), lambda b, t: (b, t, 0)),
                           pl.BlockSpec((1, tn, C), lambda b, t: (b, t, 0))],
            ),
            compiler_params=pltpu.CompilerParams(
                dimension_semantics=("parallel", "parallel"),
                vmem_limit_bytes=vmem),
        )(x_cd, wk, wv)

    tq = _pick_q_tile(N, Nk, C)
    kernel = functools.partial(_attn_kernel, num_heads=num_heads)
    # TODO(synk): on v7x, the grid-invariant weight operands could additionally
    # use pipeline_mode=pl.Buffered(1) to halve their VMEM residency.
    out = pl.pallas_call(
        kernel,
        out_shape=jax.ShapeDtypeStruct((B, N, C), out_dtype),
        grid_spec=pltpu.PrefetchScalarGridSpec(
            num_scalar_prefetch=0,
            grid=(B, N // tq),
            in_specs=[
                pl.BlockSpec((1, tq, C), lambda b, i: (b, i, 0)),
                pl.BlockSpec((1, Nk, C), lambda b, i: (b, 0, 0)),   # k resident
                pl.BlockSpec((1, Nk, C), lambda b, i: (b, 0, 0)),   # v resident
                pl.BlockSpec((C, C), lambda b, i: (0, 0)),
                pl.BlockSpec((C, C), lambda b, i: (0, 0)),
                pl.BlockSpec((1, C), lambda b, i: (0, 0)),
            ],
            out_specs=pl.BlockSpec((1, tq, C), lambda b, i: (b, i, 0)),
        ),
        compiler_params=pltpu.CompilerParams(
            dimension_semantics=("parallel", "parallel"),
            vmem_limit_bytes=vmem),
    )(x_cd, k_all, v_all, wq, wp, bp)
    return out


# ----------------------------------------------------------------------------
# Pure-JAX reference (mirrors the PyTorch forward) for a correctness check
# ----------------------------------------------------------------------------
def reference(x, H, W, params, *, num_heads, sr_ratio):
    B, N, C = x.shape
    d = C // num_heads
    scale = d ** -0.5
    q = (x @ params["q_w"]).reshape(B, N, num_heads, d).transpose(0, 2, 1, 3)
    if sr_ratio > 1:
        x_img = x.transpose(0, 2, 1).reshape(B, C, H, W)
        y = jax.lax.conv_general_dilated(
            x_img, params["sr_w"], window_strides=(sr_ratio, sr_ratio),
            padding="VALID", dimension_numbers=("NCHW", "OIHW", "NCHW"))
        y = y + params["sr_b"].reshape(1, C, 1, 1)
        y = y.reshape(B, C, -1).transpose(0, 2, 1)                  # (B, Nk, C)
        mean = y.mean(-1, keepdims=True)
        var = ((y - mean) ** 2).mean(-1, keepdims=True)
        y = (y - mean) / jnp.sqrt(var + 1e-5)
        x_ = y * params["ln_g"] + params["ln_b"]
    else:
        x_ = x
    Nk = x_.shape[1]
    kv = (x_ @ params["kv_w"]).reshape(B, Nk, 2, num_heads, d)
    kv = kv.transpose(2, 0, 3, 1, 4)
    k, v = kv[0], kv[1]                                             # (B, h, Nk, d)
    attn = jnp.einsum("bhnd,bhmd->bhnm", q, k) * scale
    attn = jax.nn.softmax(attn, axis=-1)
    o = jnp.einsum("bhnm,bhmd->bhnd", attn, v)
    o = o.transpose(0, 2, 1, 3).reshape(B, N, C)
    return o @ params["proj_w"] + params["proj_b"]


if __name__ == "__main__":
    B, C, H, W = 2, 32, 8, 8
    num_heads = 4
    N = H * W

    key = jax.random.PRNGKey(0)
    kx, k0, k1, k2, k3, k4, k5, k6, k7 = jax.random.split(key, 9)
    params = {
        "q_w":    0.05 * jax.random.normal(k0, (C, C), jnp.float32),
        "kv_w":   0.05 * jax.random.normal(k1, (C, 2 * C), jnp.float32),
        "proj_w": 0.05 * jax.random.normal(k2, (C, C), jnp.float32),
        "proj_b": 0.05 * jax.random.normal(k3, (C,), jnp.float32),
        "sr_w":   0.05 * jax.random.normal(k4, (C, C, 2, 2), jnp.float32),
        "sr_b":   0.05 * jax.random.normal(k5, (C,), jnp.float32),
        "ln_g":   1.0 + 0.1 * jax.random.normal(k6, (C,), jnp.float32),
        "ln_b":   0.1 * jax.random.normal(k7, (C,), jnp.float32),
    }
    x = jax.random.normal(kx, (B, N, C), jnp.float32)

    # Exercise both the sub-sampled (sr_ratio > 1) and plain (sr_ratio == 1) paths.
    for sr_ratio in (2, 1):
        out = gsa_attention(x, H, W, params, num_heads=num_heads, sr_ratio=sr_ratio)
        out = jax.block_until_ready(out)
        ref = reference(x, H, W, params, num_heads=num_heads, sr_ratio=sr_ratio)
        assert out.shape == (B, N, C)
        # bf16 MXU inputs (f32 accumulation / f32 softmax & LN stats) -> loosened tol.
        assert jnp.allclose(out, ref, atol=2e-2, rtol=2e-2), (
            f"sr_ratio={sr_ratio} max abs diff {jnp.max(jnp.abs(out - ref))}")
    print("KERNEL_OK")
</pallas_src>

<mosaic_0001>
module attributes {stable_mosaic.version = 11 : i64} {
  func.func @_sr_kv_kernel(%arg0: i32, %arg1: i32, %arg2: memref<1x16x128xbf16, #tpu.memory_space<vmem>>, %arg3: memref<128x32xbf16, #tpu.memory_space<vmem>>, %arg4: memref<1x32xf32, #tpu.memory_space<vmem>>, %arg5: memref<1x32xf32, #tpu.memory_space<vmem>>, %arg6: memref<1x32xf32, #tpu.memory_space<vmem>>, %arg7: memref<32x32xbf16, #tpu.memory_space<vmem>>, %arg8: memref<32x32xbf16, #tpu.memory_space<vmem>>, %arg9: memref<1x16x32xbf16, #tpu.memory_space<vmem>>, %arg10: memref<1x16x32xbf16, #tpu.memory_space<vmem>>) attributes {dimension_semantics = [#tpu.dimension_semantics<parallel>, #tpu.dimension_semantics<parallel>], iteration_bounds = array<i64: 2, 1>, scalar_prefetch = 0 : i64, scratch_operands = 0 : i64, tpu.core_type = #tpu.core_type<tc>, window_params = [{transform_indices = @transform_0, window_bounds = array<i64: 1, 16, 128>}, {pipeline_mode = #tpu.pipeline_mode<synchronous>, transform_indices = @transform_1, window_bounds = array<i64: 128, 32>}, {pipeline_mode = #tpu.pipeline_mode<synchronous>, transform_indices = @transform_2, window_bounds = array<i64: 1, 32>}, {pipeline_mode = #tpu.pipeline_mode<synchronous>, transform_indices = @transform_3, window_bounds = array<i64: 1, 32>}, {pipeline_mode = #tpu.pipeline_mode<synchronous>, transform_indices = @transform_4, window_bounds = array<i64: 1, 32>}, {pipeline_mode = #tpu.pipeline_mode<synchronous>, transform_indices = @transform_5, window_bounds = array<i64: 32, 32>}, {pipeline_mode = #tpu.pipeline_mode<synchronous>, transform_indices = @transform_6, window_bounds = array<i64: 32, 32>}, {transform_indices = @transform_7, window_bounds = array<i64: 1, 16, 32>}, {transform_indices = @transform_8, window_bounds = array<i64: 1, 16, 32>}]} {
    %c0 = arith.constant 0 : index
    %c0_0 = arith.constant 0 : index
    %c0_1 = arith.constant 0 : index
    %0 = vector.load %arg2[%c0, %c0_0, %c0_1] : memref<1x16x128xbf16, #tpu.memory_space<vmem>>, vector<1x16x128xbf16>
    %1 = vector.shape_cast %0 : vector<1x16x128xbf16> to vector<16x128xbf16>
    %c0_2 = arith.constant 0 : index
    %c0_3 = arith.constant 0 : index
    %2 = vector.load %arg3[%c0_2, %c0_3] : memref<128x32xbf16, #tpu.memory_space<vmem>>, vector<128x32xbf16>
    %cst = arith.constant dense<0.000000e+00> : vector<16x32xf32>
    %3 = tpu.matmul %1, %2, %cst {dimension_numbers = #tpu.dot_dimension_numbers<[1], [0], [0], [1], [0, 0, 1, 1], [], []>} : vector<16x128xbf16>, vector<128x32xbf16>, vector<16x32xf32> -> vector<16x32xf32>
    %c0_4 = arith.constant 0 : index
    %c0_5 = arith.constant 0 : index
    %4 = vector.load %arg4[%c0_4, %c0_5] : memref<1x32xf32, #tpu.memory_space<vmem>>, vector<1x32xf32>
    %5 = vector.broadcast %4 : vector<1x32xf32> to vector<16x32xf32>
    %6 = arith.addf %3, %5 : vector<16x32xf32>
    %cst_6 = arith.constant dense<0.000000e+00> : vector<16xf32>
    %7 = vector.multi_reduction <add>, %6, %cst_6 [1] : vector<16x32xf32> to vector<16xf32>
    %8 = vector.shape_cast %7 : vector<16xf32> to vector<16x1xf32>
    %cst_7 = arith.constant 3.200000e+01 : f32
    %9 = vector.broadcast %cst_7 : f32 to vector<16x1xf32>
    %10 = arith.divf %8, %9 : vector<16x1xf32>
    %11 = vector.broadcast %10 : vector<16x1xf32> to vector<16x32xf32>
    %12 = arith.subf %6, %11 : vector<16x32xf32>
    %13 = arith.mulf %12, %12 : vector<16x32xf32>
    %cst_8 = arith.constant dense<0.000000e+00> : vector<16xf32>
    %14 = vector.multi_reduction <add>, %13, %cst_8 [1] : vector<16x32xf32> to vector<16xf32>
    %15 = vector.shape_cast %14 : vector<16xf32> to vector<16x1xf32>
    %cst_9 = arith.constant 3.200000e+01 : f32
    %16 = vector.broadcast %cst_9 : f32 to vector<16x1xf32>
    %17 = arith.divf %15, %16 : vector<16x1xf32>
    %18 = vector.broadcast %10 : vector<16x1xf32> to vector<16x32xf32>
    %19 = arith.subf %6, %18 : vector<16x32xf32>
    %cst_10 = arith.constant 9.99999974E-6 : f32
    %20 = vector.broadcast %cst_10 : f32 to vector<16x1xf32>
    %21 = arith.addf %17, %20 : vector<16x1xf32>
    %22 = math.rsqrt %21 : vector<16x1xf32>
    %23 = vector.broadcast %22 : vector<16x1xf32> to vector<16x32xf32>
    %24 = arith.mulf %19, %23 : vector<16x32xf32>
    %c0_11 = arith.constant 0 : index
    %c0_12 = arith.constant 0 : index
    %25 = vector.load %arg5[%c0_11, %c0_12] : memref<1x32xf32, #tpu.memory_space<vmem>>, vector<1x32xf32>
    %26 = vector.broadcast %25 : vector<1x32xf32> to vector<16x32xf32>
    %27 = arith.mulf %24, %26 : vector<16x32xf32>
    %c0_13 = arith.constant 0 : index
    %c0_14 = arith.constant 0 : index
    %28 = vector.load %arg6[%c0_13, %c0_14] : memref<1x32xf32, #tpu.memory_space<vmem>>, vector<1x32xf32>
    %29 = vector.broadcast %28 : vector<1x32xf32> to vector<16x32xf32>
    %30 = arith.addf %27, %29 : vector<16x32xf32>
    %31 = arith.truncf %30 : vector<16x32xf32> to vector<16x32xbf16>
    %c0_15 = arith.constant 0 : index
    %c0_16 = arith.constant 0 : index
    %32 = vector.load %arg7[%c0_15, %c0_16] : memref<32x32xbf16, #tpu.memory_space<vmem>>, vector<32x32xbf16>
    %cst_17 = arith.constant dense<0.000000e+00> : vector<16x32xf32>
    %33 = tpu.matmul %31, %32, %cst_17 {dimension_numbers = #tpu.dot_dimension_numbers<[1], [0], [0], [1], [0, 0, 1, 1], [], []>} : vector<16x32xbf16>, vector<32x32xbf16>, vector<16x32xf32> -> vector<16x32xf32>
    %34 = arith.truncf %33 : vector<16x32xf32> to vector<16x32xbf16>
    %c0_18 = arith.constant 0 : index
    %c0_19 = arith.constant 0 : index
    %c0_20 = arith.constant 0 : index
    %35 = vector.load %arg9[%c0_18, %c0_19, %c0_20] : memref<1x16x32xbf16, #tpu.memory_space<vmem>>, vector<1x16x32xbf16>
    %36 = vector.shape_cast %35 : vector<1x16x32xbf16> to vector<16x32xbf16>
    %37 = vector.shape_cast %34 : vector<16x32xbf16> to vector<1x16x32xbf16>
    tpu.vector_store %arg9[%c0_18, %c0_19, %c0_20], %37 {strides = array<i32>} : memref<1x16x32xbf16, #tpu.memory_space<vmem>>, vector<1x16x32xbf16>,
    %c0_21 = arith.constant 0 : index
    %c0_22 = arith.constant 0 : index
    %38 = vector.load %arg8[%c0_21, %c0_22] : memref<32x32xbf16, #tpu.memory_space<vmem>>, vector<32x32xbf16>
    %cst_23 = arith.constant dense<0.000000e+00> : vector<16x32xf32>
    %39 = tpu.matmul %31, %38, %cst_23 {dimension_numbers = #tpu.dot_dimension_numbers<[1], [0], [0], [1], [0, 0, 1, 1], [], []>} : vector<16x32xbf16>, vector<32x32xbf16>, vector<16x32xf32> -> vector<16x32xf32>
    %40 = arith.truncf %39 : vector<16x32xf32> to vector<16x32xbf16>
    %c0_24 = arith.constant 0 : index
    %c0_25 = arith.constant 0 : index
    %c0_26 = arith.constant 0 : index
    %41 = vector.load %arg10[%c0_24, %c0_25, %c0_26] : memref<1x16x32xbf16, #tpu.memory_space<vmem>>, vector<1x16x32xbf16>
    %42 = vector.shape_cast %41 : vector<1x16x32xbf16> to vector<16x32xbf16>
    %43 = vector.shape_cast %40 : vector<16x32xbf16> to vector<1x16x32xbf16>
    tpu.vector_store %arg10[%c0_24, %c0_25, %c0_26], %43 {strides = array<i32>} : memref<1x16x32xbf16, #tpu.memory_space<vmem>>, vector<1x16x32xbf16>,
    return
  }
  func.func @transform_0(%arg0: i32, %arg1: i32) -> (i32, i32, i32) {
    %c0_i32 = arith.constant 0 : i32
    %c0_i32_0 = arith.constant 0 : i32
    return %arg0, %arg1, %c0_i32 : i32, i32, i32
  }
  func.func @transform_1(%arg0: i32, %arg1: i32) -> (i32, i32) {
    %c0_i32 = arith.constant 0 : i32
    %c0_i32_0 = arith.constant 0 : i32
    %c0_i32_1 = arith.constant 0 : i32
    return %c0_i32, %c0_i32_0 : i32, i32
  }
  func.func @transform_2(%arg0: i32, %arg1: i32) -> (i32, i32) {
    %c0_i32 = arith.constant 0 : i32
    %c0_i32_0 = arith.constant 0 : i32
    %c0_i32_1 = arith.constant 0 : i32
    return %c0_i32, %c0_i32_0 : i32, i32
  }
  func.func @transform_3(%arg0: i32, %arg1: i32) -> (i32, i32) {
    %c0_i32 = arith.constant 0 : i32
    %c0_i32_0 = arith.constant 0 : i32
    %c0_i32_1 = arith.constant 0 : i32
    return %c0_i32, %c0_i32_0 : i32, i32
  }
  func.func @transform_4(%arg0: i32, %arg1: i32) -> (i32, i32) {
    %c0_i32 = arith.constant 0 : i32
    %c0_i32_0 = arith.constant 0 : i32
    %c0_i32_1 = arith.constant 0 : i32
    return %c0_i32, %c0_i32_0 : i32, i32
  }
  func.func @transform_5(%arg0: i32, %arg1: i32) -> (i32, i32) {
    %c0_i32 = arith.constant 0 : i32
    %c0_i32_0 = arith.constant 0 : i32
    %c0_i32_1 = arith.constant 0 : i32
    return %c0_i32, %c0_i32_0 : i32, i32
  }
  func.func @transform_6(%arg0: i32, %arg1: i32) -> (i32, i32) {
    %c0_i32 = arith.constant 0 : i32
    %c0_i32_0 = arith.constant 0 : i32
    %c0_i32_1 = arith.constant 0 : i32
    return %c0_i32, %c0_i32_0 : i32, i32
  }
  func.func @transform_7(%arg0: i32, %arg1: i32) -> (i32, i32, i32) {
    %c0_i32 = arith.constant 0 : i32
    %c0_i32_0 = arith.constant 0 : i32
    return %arg0, %arg1, %c0_i32 : i32, i32, i32
  }
  func.func @transform_8(%arg0: i32, %arg1: i32) -> (i32, i32, i32) {
    %c0_i32 = arith.constant 0 : i32
    %c0_i32_0 = arith.constant 0 : i32
    return %arg0, %arg1, %c0_i32 : i32, i32, i32
  }
}

</mosaic_0001>

<llo_original>
// kernel: tpu_custom_call.1
$region0: #{tpu_custom_call.1}
  #allocation0 [shape = 'u32[]', space=smem, size = 0x4, offset = 0x4, fixed_abs, tag = 'smem constant byte address 0x4 - core index']
  #allocation1 [shape = 'u32[144,128]{1,0:T(1,128)}', space=vmem, size = 0x12000, scoped, tag = 'internal scratch']
  %s0 = inlined_call_operand.vmem [shape: bf16[2,16,128], index: 0, kind: input, shape index: {}]
  %s1 = inlined_call_operand.vmem [shape: bf16[128,32], index: 1, kind: input, shape index: {}]
  %s2 = inlined_call_operand.vmem [shape: f32[1,32], index: 2, kind: input, shape index: {}]
  %s3 = inlined_call_operand.vmem [shape: f32[1,32], index: 3, kind: input, shape index: {}]
  %s4 = inlined_call_operand.vmem [shape: f32[1,32], index: 4, kind: input, shape index: {}]
  %s5 = inlined_call_operand.vmem [shape: bf16[32,32], index: 5, kind: input, shape index: {}]
  %s6 = inlined_call_operand.vmem [shape: bf16[32,32], index: 6, kind: input, shape index: {}]
  %s7 = inlined_call_operand.hbm [shape: bf16[2,16,32], index: 7, kind: output, shape index: {0}]
  %s8 = inlined_call_operand.hbm [shape: bf16[2,16,32], index: 8, kind: output, shape index: {1}]
  %9 = xla_tuple %s7, %s8
  %s10 = sld [smem:[#allocation0]]
  $region69: #{tpu_custom_call.1} parent=0
    _
  %s12 = ssub.s32 1, %s10
  %s13 = scalar_select 0, %s12, %s10
  $region1: #{tpu_custom_call.1} parent=0
    #allocation2 [shape = 'u8[8192]{0}', space=vmem, size = 0x2000, scoped, tag = 'output window, operand 0']
    #allocation3 [shape = 's32[2]{0}', space=sflag, size = 0x8, scoped, tag = 'scoped memory for tpu_custom_call.1']
    #allocation4 [shape = 'u8[8192]{0}', space=vmem, size = 0x2000, scoped, tag = 'output window, operand 1']
    #allocation5 [shape = 's32[2]{0}', space=sflag, size = 0x8, scoped, tag = 'scoped memory for tpu_custom_call.1']
    %14 = vsyncpa [#allocation3], 0
    %s15 = scalar_lea.sflag [#allocation3], 1
    %16 = vsyncpa %s15, 0
    %17 = vsyncpa [#allocation5], 0
    %s18 = scalar_lea.sflag [#allocation5], 1
    %19 = vsyncpa %s18, 0
    loop: start=0, step=1, limit=4
    $region2: #{tpu_custom_call.1} parent=1 // loop_pre_header
      _
    $region3: #{tpu_custom_call.1} parent=1 // loop_header
      %s21 = sphi 0, %s25
      %p22 = scmp.ge.s32.totalorder %s21, 4
      %s28 = sphi 0, %s40
      %s29 = sphi 0, %s36
      %s30 = sphi 0, %s28
      %s31 = sphi 0, %s29
      %s32 = sphi 0, %s30
      %s33 = sphi 0, %s31
      %s45 = sphi 0, %s47
      %s48 = sphi 0, %s45
      %s49 = sphi 0, %s48
      %s65 = sphi 0, %s49
      %s69 = sphi 0, %s69
      %s71 = sphi 0, %s69
      %s72 = sphi 0, %s71
      %s86 = sphi 0, %s72
      %s90 = sphi 0, %s90
      %s92 = sphi 0, %s90
      %s93 = sphi 0, %s92
      %s107 = sphi 0, %s93
      %s111 = sphi 0, %s111
      %s113 = sphi 0, %s111
      %s114 = sphi 0, %s113
      %s128 = sphi 0, %s114
      %s132 = sphi 0, %s132
      %s134 = sphi 0, %s132
      %s135 = sphi 0, %s134
      %s149 = sphi 0, %s135
      %s153 = sphi 0, %s153
      %s155 = sphi 0, %s153
      %s156 = sphi 0, %s155
      %s170 = sphi 0, %s156
      %s174 = sphi 0, %s174
      %s176 = sphi 0, %s174
      %s177 = sphi 0, %s176
      %s191 = sphi 0, %s177
      %s199 = sphi 0, %s201
      %s202 = sphi 0, %s199
      %s203 = sphi 0, %s202
      %s219 = sphi 0, %s203
      %s227 = sphi 0, %s229
      %s230 = sphi 0, %s227
      %s231 = sphi 0, %s230
      %s247 = sphi 0, %s231
    $region4: #{tpu_custom_call.1} parent=1 // loop_header_branch
      %24 = sbr.rel (%p22) target = $region8
    $region5: #{tpu_custom_call.1} parent=1 // loop_body
      %s26 = ssub.s32 %s21, 1
      %s27 = ssub.s32 %s21, 2
      %s34 = sadd.s32 1, %s29
      %p35 = scmp.ge.s32.totalorder %s34, 1
      %s36 = scalar_select %p35, 0, %s34
      %s37 = sadd.s32 1, %s28
      %s38 = scalar_select %p35, %s37, %s28
      %p39 = scmp.ge.s32.totalorder %s38, 2
      %s40 = scalar_select %p39, 0, %s38
      %s41 = ssub.s32 %s28, %s40
      %s42 = ssub.s32 %s29, %s36
      %s43 = sor.u32 %s41, %s42
      %p44 = scmp.eq.s32.totalorder %s43, 0
      %s46 = sadd.s32 %s45, 1
      %s47 = scalar_select %p44, %s45, %s46
      %p50 = pneg %p44
      %p51 = scmp.eq.s32.totalorder %s21, 1
      %p52 = por %p50, %p51
      %p53 = scmp.ne.s32.totalorder %s45, %s48
      %p54 = scmp.eq.s32.totalorder %s21, 0
      %p55 = por %p53, %p54
      %p56 = scmp.ne.s32.totalorder %s45, %s48
      %p57 = scmp.eq.s32.totalorder %s26, 1
      %p58 = por %p56, %p57
      %p59 = scmp.ne.s32.totalorder %s48, %s49
      %p60 = scmp.eq.s32.totalorder %s26, 0
      %p61 = por %p59, %p60
      %p62 = scmp.ne.s32.totalorder %s48, %s49
      %p63 = scmp.eq.s32.totalorder %s27, 1
      %p64 = por %p62, %p63
      %p66 = scmp.ne.s32.totalorder %s49, %s65
      %p67 = scmp.eq.s32.totalorder %s27, 0
      %p68 = por %p66, %p67
      %s70 = sadd.s32 %s69, 1
      %p73 = scmp.eq.s32.totalorder %s21, 1
      %p74 = scmp.ne.s32.totalorder %s69, %s71
      %p75 = scmp.eq.s32.totalorder %s21, 0
      %p76 = por %p74, %p75
      %p77 = scmp.ne.s32.totalorder %s69, %s71
      %p78 = scmp.eq.s32.totalorder %s26, 1
      %p79 = por %p77, %p78
      %p80 = scmp.ne.s32.totalorder %s71, %s72
      %p81 = scmp.eq.s32.totalorder %s26, 0
      %p82 = por %p80, %p81
      %p83 = scmp.ne.s32.totalorder %s71, %s72
      %p84 = scmp.eq.s32.totalorder %s27, 1
      %p85 = por %p83, %p84
      %p87 = scmp.ne.s32.totalorder %s72, %s86
      %p88 = scmp.eq.s32.totalorder %s27, 0
      %p89 = por %p87, %p88
      %s91 = sadd.s32 %s90, 1
      %p94 = scmp.eq.s32.totalorder %s21, 1
      %p95 = scmp.ne.s32.totalorder %s90, %s92
      %p96 = scmp.eq.s32.totalorder %s21, 0
      %p97 = por %p95, %p96
      %p98 = scmp.ne.s32.totalorder %s90, %s92
      %p99 = scmp.eq.s32.totalorder %s26, 1
      %p100 = por %p98, %p99
      %p101 = scmp.ne.s32.totalorder %s92, %s93
      %p102 = scmp.eq.s32.totalorder %s26, 0
      %p103 = por %p101, %p102
      %p104 = scmp.ne.s32.totalorder %s92, %s93
      %p105 = scmp.eq.s32.totalorder %s27, 1
      %p106 = por %p104, %p105
      %p108 = scmp.ne.s32.totalorder %s93, %s107
      %p109 = scmp.eq.s32.totalorder %s27, 0
      %p110 = por %p108, %p109
      %s112 = sadd.s32 %s111, 1
      %p115 = scmp.eq.s32.totalorder %s21, 1
      %p116 = scmp.ne.s32.totalorder %s111, %s113
      %p117 = scmp.eq.s32.totalorder %s21, 0
      %p118 = por %p116, %p117
      %p119 = scmp.ne.s32.totalorder %s111, %s113
      %p120 = scmp.eq.s32.totalorder %s26, 1
      %p121 = por %p119, %p120
      %p122 = scmp.ne.s32.totalorder %s113, %s114
      %p123 = scmp.eq.s32.totalorder %s26, 0
      %p124 = por %p122, %p123
      %p125 = scmp.ne.s32.totalorder %s113, %s114
      %p126 = scmp.eq.s32.totalorder %s27, 1
      %p127 = por %p125, %p126
      %p129 = scmp.ne.s32.totalorder %s114, %s128
      %p130 = scmp.eq.s32.totalorder %s27, 0
      %p131 = por %p129, %p130
      %s133 = sadd.s32 %s132, 1
      %p136 = scmp.eq.s32.totalorder %s21, 1
      %p137 = scmp.ne.s32.totalorder %s132, %s134
      %p138 = scmp.eq.s32.totalorder %s21, 0
      %p139 = por %p137, %p138
      %p140 = scmp.ne.s32.totalorder %s132, %s134
      %p141 = scmp.eq.s32.totalorder %s26, 1
      %p142 = por %p140, %p141
      %p143 = scmp.ne.s32.totalorder %s134, %s135
      %p144 = scmp.eq.s32.totalorder %s26, 0
      %p145 = por %p143, %p144
      %p146 = scmp.ne.s32.totalorder %s134, %s135
      %p147 = scmp.eq.s32.totalorder %s27, 1
      %p148 = por %p146, %p147
      %p150 = scmp.ne.s32.totalorder %s135, %s149
      %p151 = scmp.eq.s32.totalorder %s27, 0
      %p152 = por %p150, %p151
      %s154 = sadd.s32 %s153, 1
      %p157 = scmp.eq.s32.totalorder %s21, 1
      %p158 = scmp.ne.s32.totalorder %s153, %s155
      %p159 = scmp.eq.s32.totalorder %s21, 0
      %p160 = por %p158, %p159
      %p161 = scmp.ne.s32.totalorder %s153, %s155
      %p162 = scmp.eq.s32.totalorder %s26, 1
      %p163 = por %p161, %p162
      %p164 = scmp.ne.s32.totalorder %s155, %s156
      %p165 = scmp.eq.s32.totalorder %s26, 0
      %p166 = por %p164, %p165
      %p167 = scmp.ne.s32.totalorder %s155, %s156
      %p168 = scmp.eq.s32.totalorder %s27, 1
      %p169 = por %p167, %p168
      %p171 = scmp.ne.s32.totalorder %s156, %s170
      %p172 = scmp.eq.s32.totalorder %s27, 0
      %p173 = por %p171, %p172
      %s175 = sadd.s32 %s174, 1
      %p178 = scmp.eq.s32.totalorder %s21, 1
      %p179 = scmp.ne.s32.totalorder %s174, %s176
      %p180 = scmp.eq.s32.totalorder %s21, 0
      %p181 = por %p179, %p180
      %p182 = scmp.ne.s32.totalorder %s174, %s176
      %p183 = scmp.eq.s32.totalorder %s26, 1
      %p184 = por %p182, %p183
      %p185 = scmp.ne.s32.totalorder %s176, %s177
      %p186 = scmp.eq.s32.totalorder %s26, 0
      %p187 = por %p185, %p186
      %p188 = scmp.ne.s32.totalorder %s176, %s177
      %p189 = scmp.eq.s32.totalorder %s27, 1
      %p190 = por %p188, %p189
      %p192 = scmp.ne.s32.totalorder %s177, %s191
      %p193 = scmp.eq.s32.totalorder %s27, 0
      %p194 = por %p192, %p193
      %s195 = ssub.s32 %s28, %s40
      %s196 = ssub.s32 %s29, %s36
      %s197 = sor.u32 %s195, %s196
      %p198 = scmp.eq.s32.totalorder %s197, 0
      %s200 = sadd.s32 %s199, 1
      %s201 = scalar_select %p198, %s199, %s200
      %p204 = pneg %p198
      %p205 = scmp.eq.s32.totalorder %s21, 1
      %p206 = por %p204, %p205
      %p207 = scmp.ne.s32.totalorder %s199, %s202
      %p208 = scmp.eq.s32.totalorder %s21, 0
      %p209 = por %p207, %p208
      %p210 = scmp.ne.s32.totalorder %s199, %s202
      %p211 = scmp.eq.s32.totalorder %s26, 1
      %p212 = por %p210, %p211
      %p213 = scmp.ne.s32.totalorder %s202, %s203
      %p214 = scmp.eq.s32.totalorder %s26, 0
      %p215 = por %p213, %p214
      %p216 = scmp.ne.s32.totalorder %s202, %s203
      %p217 = scmp.eq.s32.totalorder %s27, 1
      %p218 = por %p216, %p217
      %p220 = scmp.ne.s32.totalorder %s203, %s219
      %p221 = scmp.eq.s32.totalorder %s27, 0
      %p222 = por %p220, %p221
      %s223 = ssub.s32 %s28, %s40
      %s224 = ssub.s32 %s29, %s36
      %s225 = sor.u32 %s223, %s224
      %p226 = scmp.eq.s32.totalorder %s225, 0
      %s228 = sadd.s32 %s227, 1
      %s229 = scalar_select %p226, %s227, %s228
      %p232 = pneg %p226
      %p233 = scmp.eq.s32.totalorder %s21, 1
      %p234 = por %p232, %p233
      %p235 = scmp.ne.s32.totalorder %s227, %s230
      %p236 = scmp.eq.s32.totalorder %s21, 0
      %p237 = por %p235, %p236
      %p238 = scmp.ne.s32.totalorder %s227, %s230
      %p239 = scmp.eq.s32.totalorder %s26, 1
      %p240 = por %p238, %p239
      %p241 = scmp.ne.s32.totalorder %s230, %s231
      %p242 = scmp.eq.s32.totalorder %s26, 0
      %p243 = por %p241, %p242
      %p244 = scmp.ne.s32.totalorder %s230, %s231
      %p245 = scmp.eq.s32.totalorder %s27, 1
      %p246 = por %p244, %p245
      %p248 = scmp.ne.s32.totalorder %s231, %s247
      %p249 = scmp.eq.s32.totalorder %s27, 0
      %p250 = por %p248, %p249
      %p251 = scmp.le.s32.totalorder 1, %s21
      %p252 = scmp.lt.s32.totalorder %s21, 3
      %p253 = pnand %p251, %p252
      %p254 = pneg %p253
      // Predicated region
      $region9: #{tpu_custom_call.1} parent=5 // pred_check
        _
      $region10: #{tpu_custom_call.1} parent=5 // pred_check_branch
        %256 = sbr.rel (%p253) target = $region12
      $region11: #{tpu_custom_call.1} parent=5 // pred_region
        %s257 = ssub.s32 %s21, 1
        // Predicated region
        $region13: #{tpu_custom_call.1} parent=11 // pred_check
          %p258 = pneg %p82
        $region14: #{tpu_custom_call.1} parent=11 // pred_check_branch
          %260 = sbr.rel (%p258) target = $region16
        $region15: #{tpu_custom_call.1} parent=11 // pred_region
          _
        $region16: #{tpu_custom_call.1} parent=11 // pred_fallthru
          _
        // Predicated region
        $region17: #{tpu_custom_call.1} parent=11 // pred_check
          %p261 = pneg %p103
        $region18: #{tpu_custom_call.1} parent=11 // pred_check_branch
          %263 = sbr.rel (%p261) target = $region20
        $region19: #{tpu_custom_call.1} parent=11 // pred_region
          _
        $region20: #{tpu_custom_call.1} parent=11 // pred_fallthru
          _
        // Predicated region
        $region21: #{tpu_custom_call.1} parent=11 // pred_check
          %p264 = pneg %p124
        $region22: #{tpu_custom_call.1} parent=11 // pred_check_branch
          %266 = sbr.rel (%p264) target = $region24
        $region23: #{tpu_custom_call.1} parent=11 // pred_region
          _
        $region24: #{tpu_custom_call.1} parent=11 // pred_fallthru
          _
        // Predicated region
        $region25: #{tpu_custom_call.1} parent=11 // pred_check
          %p267 = pneg %p145
        $region26: #{tpu_custom_call.1} parent=11 // pred_check_branch
          %269 = sbr.rel (%p267) target = $region28
        $region27: #{tpu_custom_call.1} parent=11 // pred_region
          _
        $region28: #{tpu_custom_call.1} parent=11 // pred_fallthru
          _
        // Predicated region
        $region29: #{tpu_custom_call.1} parent=11 // pred_check
          %p270 = pneg %p166
        $region30: #{tpu_custom_call.1} parent=11 // pred_check_branch
          %272 = sbr.rel (%p270) target = $region32
        $region31: #{tpu_custom_call.1} parent=11 // pred_region
          _
        $region32: #{tpu_custom_call.1} parent=11 // pred_fallthru
          _
        // Predicated region
        $region33: #{tpu_custom_call.1} parent=11 // pred_check
          %p273 = pneg %p187
        $region34: #{tpu_custom_call.1} parent=11 // pred_check_branch
          %275 = sbr.rel (%p273) target = $region36
        $region35: #{tpu_custom_call.1} parent=11 // pred_region
          _
        $region36: #{tpu_custom_call.1} parent=11 // pred_fallthru
          _
      $region12: #{tpu_custom_call.1} parent=5 // pred_fallthru
        _
      %p276 = scmp.lt.s32.totalorder %s21, 2
      // Predicated region
      $region37: #{tpu_custom_call.1} parent=5 // pred_check
        %p277 = pneg %p276
      $region38: #{tpu_custom_call.1} parent=5 // pred_check_branch
        %279 = sbr.rel (%p277) target = $region40
      $region39: #{tpu_custom_call.1} parent=5 // pred_region
        // Predicated region
        $region41: #{tpu_custom_call.1} parent=39 // pred_check
          %p280 = pneg %p55
        $region42: #{tpu_custom_call.1} parent=39 // pred_check_branch
          %282 = sbr.rel (%p280) target = $region44
        $region43: #{tpu_custom_call.1} parent=39 // pred_region
          %s283 = smul.u32 2, %s29
          %p284 = scmp.lt.s32.totalorder %s28, 1
          %s285 = scalar_select %p284, %s28, 1
          %p286 = scmp.lt.s32.totalorder %s283, 1
          %s287 = scalar_select %p286, %s283, 1
          %s288 = smul.addr %s285, 2
          %s289 = sadd.s32 %s287, %s288
          %s290 = smul.addr %s289, 4
          %s291 = scalar_lea.vmem %s0, %s290
          %s292 = smul.u32 2, %s29
        $region44: #{tpu_custom_call.1} parent=39 // pred_fallthru
          _
      $region40: #{tpu_custom_call.1} parent=5 // pred_fallthru
        _
      %p293 = scmp.le.s32.totalorder 1, %s21
      %p294 = scmp.lt.s32.totalorder %s21, 3
      %p295 = pnand %p293, %p294
      %p296 = pneg %p295
      // Predicated region
      $region45: #{tpu_custom_call.1} parent=5 // pred_check
        _
      $region46: #{tpu_custom_call.1} parent=5 // pred_check_branch
        %298 = sbr.rel (%p295) target = $region48
      $region47: #{tpu_custom_call.1} parent=5 // pred_region
        %s299 = ssub.s32 %s21, 1
        %s300 = smul.u32 2, %s31
        %p301 = scmp.lt.s32.totalorder %s30, 1
        %s302 = scalar_select %p301, %s30, 1
        %p303 = scmp.lt.s32.totalorder %s300, 1
        %s304 = scalar_select %p303, %s300, 1
        %s305 = smul.addr %s302, 2
        %s306 = sadd.s32 %s304, %s305
        %s307 = smul.addr %s306, 4
        %s308 = scalar_lea.vmem %s0, %s307
        %p309 = pneg %p61
        %p310 = pneg %p58
        %p311 = pneg %p82
        %p312 = pneg %p79
        %p313 = pneg %p103
        %p314 = pneg %p100
        %p315 = pneg %p124
        %p316 = pneg %p121
        %p317 = pneg %p145
        %p318 = pneg %p142
        %p319 = pneg %p166
        %p320 = pneg %p163
        %p321 = pneg %p187
        %p322 = pneg %p184
        %p323 = pneg %p215
        %p324 = pneg %p212
        %s325 = sand.u32 %s202, 1
        %s326 = scalar_lea.sflag [#allocation3], %s325
        %s327 = sand.u32 %s202, 1
        %s328 = smul.addr %s327, 8
        %s329 = scalar_lea.vmem [#allocation2], %s328
        %p330 = pneg %p243
        %p331 = pneg %p240
        %s332 = sand.u32 %s230, 1
        %s333 = scalar_lea.sflag [#allocation5], %s332
        %s334 = sand.u32 %s230, 1
        %s335 = smul.addr %s334, 8
        %s336 = scalar_lea.vmem [#allocation4], %s335
        %s337 = smul.u32 2, %s31
        %p338 = scmp.lt.s32.totalorder %s30, 1
        %s339 = scalar_select %p338, %s30, 1
        %p340 = scmp.lt.s32.totalorder %s337, 1
        %s341 = scalar_select %p340, %s337, 1
        %s342 = smul.addr %s339, 2
        %s343 = sadd.s32 %s341, %s342
        %s344 = smul.addr %s343, 4
        %s345 = scalar_lea.vmem %s0, %s344
        %s346 = smul.u32 2, %s31
        %s347 = smul.u32 2, %s31
        %s348 = smul.u32 2, %s31
        %v350 = vld [vmem:[%s345] sm:$0xf]
        %v351 = vld [vmem:[%s345 + $0x4] sm:$0xf]
        %v352 = vld [vmem:[%s1] sm:$0xf]
        %v353 = vld [vmem:[%s1 + $0x4] sm:$0xf]
        %v354 = vld [vmem:[%s1 + $0x8] sm:$0xf]
        %v355 = vld [vmem:[%s1 + $0xc] sm:$0xf]
        %v356 = vld [vmem:[%s1 + $0x10] sm:$0xf]
        %v357 = vld [vmem:[%s1 + $0x14] sm:$0xf]
        %v358 = vld [vmem:[%s1 + $0x18] sm:$0xf]
        %v359 = vld [vmem:[%s1 + $0x1c] sm:$0xf]
        %v360 = vld [vmem:[%s1 + $0x20] sm:$0xf]
        %v361 = vld [vmem:[%s1 + $0x24] sm:$0xf]
        %v362 = vld [vmem:[%s1 + $0x28] sm:$0xf]
        %v363 = vld [vmem:[%s1 + $0x2c] sm:$0xf]
        %v364 = vld [vmem:[%s1 + $0x30] sm:$0xf]
        %v365 = vld [vmem:[%s1 + $0x34] sm:$0xf]
        %v366 = vld [vmem:[%s1 + $0x38] sm:$0xf]
        %v367 = vld [vmem:[%s1 + $0x3c] sm:$0xf]
        %v368 = vld [vmem:[%s2] sm:$0x1]
        %v370 = vlaneseq
        %v371 = vshrl.u32 %v370, 7
        %v372 = vsub.s32 0, %v371
        %v373 = vrot.slane %v368, %v372
        %v377 = vunpack.c.l.b16 %v350
        %v378 = vunpack.c.l.b16 %v351
        %v379 = vpack.c.b16 %v378, %v377
        %v397 = vunpack.c.l.b16 %v352
        %v398 = vunpack.c.l.b16 %v353
        %v399 = vunpack.c.l.b16 %v354
        %v400 = vunpack.c.l.b16 %v355
        %v401 = vunpack.c.l.b16 %v356
        %v402 = vunpack.c.l.b16 %v357
        %v403 = vunpack.c.l.b16 %v358
        %v404 = vunpack.c.l.b16 %v359
        %v405 = vunpack.c.l.b16 %v360
        %v406 = vunpack.c.l.b16 %v361
        %v407 = vunpack.c.l.b16 %v362
        %v408 = vunpack.c.l.b16 %v363
        %v409 = vunpack.c.l.b16 %v364
        %v410 = vunpack.c.l.b16 %v365
        %v411 = vunpack.c.l.b16 %v366
        %v412 = vunpack.c.l.b16 %v367
        %v413 = vpack.c.b16 %v398, %v397
        %v414 = vpack.c.b16 %v400, %v399
        %v415 = vpack.c.b16 %v402, %v401
        %v416 = vpack.c.b16 %v404, %v403
        %v417 = vpack.c.b16 %v406, %v405
        %v418 = vpack.c.b16 %v408, %v407
        %v419 = vpack.c.b16 %v410, %v409
        %v420 = vpack.c.b16 %v412, %v411
        %429 = vmatprep.subr.bf16.mxu0 0
        %430 = vmatpush1.bf16.msra.mxu0 %v413
        %431 = vmatprep.subr.bf16.mxu0 0
        %432 = vmatpush1.bf16.msra.mxu0 %v414
        %433 = vmatprep.subr.bf16.mxu0 0
        %434 = vmatpush1.bf16.msra.mxu0 %v415
        %435 = vmatprep.subr.bf16.mxu0 0
        %436 = vmatpush1.bf16.msra.mxu0 %v416
        %437 = vmatprep.subr.bf16.mxu0 0
        %438 = vmatpush1.bf16.msra.mxu0 %v417
        %439 = vmatprep.subr.bf16.mxu0 0
        %440 = vmatpush1.bf16.msra.mxu0 %v418
        %441 = vmatprep.subr.bf16.mxu0 0
        %442 = vmatpush1.bf16.msra.mxu0 %v419
        %443 = vmatprep.subr.bf16.mxu0 0
        %444 = vmatpush1.bf16.msra.mxu0 %v420
        %445 = vmatprep.subr.bf16.mxu0 0
        %446 = vmatpush1.bf16.msra.mxu0 0
        %447 = vmatprep.subr.bf16.mxu0 0
        %448 = vmatpush1.bf16.msra.mxu0 0
        %449 = vmatprep.subr.bf16.mxu0 0
        %450 = vmatpush1.bf16.msra.mxu0 0
        %451 = vmatprep.subr.bf16.mxu0 0
        %452 = vmatpush1.bf16.msra.mxu0 0
        %453 = vmatprep.subr.bf16.mxu0 0
        %454 = vmatpush1.bf16.msra.mxu0 0
        %455 = vmatprep.subr.bf16.mxu0 0
        %456 = vmatpush1.bf16.msra.mxu0 0
        %457 = vmatprep.subr.bf16.mxu0 0
        %458 = vmatpush1.bf16.msra.mxu0 0
        %459 = vmatprep.subr.bf16.mxu0 0
        %460 = vmatpush1.bf16.msra.mxu0 0
        %461 = vmatprep.mubr.bf16.mxu0 0
        %462 = vmatmul.mubr.bf16.gmra.mrb[0].mxu0 %v379
        %v463 = vpop.f32.mrb[0].mxu0
        %v464 = vadd.f32 %v373, %v463
        %v465 = vpop.f32.mrb[0].mxu0
        %v466 = vpop.f32.mrb[0].mxu0
        %v467 = vadd.f32 %v373, %v466
        %v468 = vpop.f32.mrb[0].mxu0
        %469 = vdwg.mxu0
        %vm470 = vcmask 261120
        %v471 = vsel %vm470, %v464, 0.0
        %472 = vadd.xlane.f32.xlu0 %v471
        %v473 = vpop.xlane.xlu0 %472
        %v474 = vsel %vm470, %v467, 0.0
        %475 = vadd.xlane.f32.xlu0 %v474
        %v476 = vpop.xlane.xlu0 %475
        %v477 = vrcp.pop 32.0
        %v478 = vmul.f32 %v473, %v477
        %v479 = vmul.f32 %v476, %v477
        %v480 = vsub.f32 %v464, %v478
        %v481 = vsub.f32 %v467, %v479
        %v482 = vmul.f32 %v480, %v480
        %v483 = vmul.f32 %v481, %v481
        %v484 = vsel %vm470, %v482, 0.0
        %485 = vadd.xlane.f32.xlu0 %v484
        %v486 = vpop.xlane.xlu0 %485
        %v487 = vsel %vm470, %v483, 0.0
        %488 = vadd.xlane.f32.xlu0 %v487
        %v489 = vpop.xlane.xlu0 %488
        %v490 = vmul.f32 %v486, %v477
        %v491 = vmul.f32 %v489, %v477
        %v492 = vadd.f32 %v490, 1e-05
        %v493 = vadd.f32 %v491, 1e-05
        %v494 = vrsqrt.pop %v492
        %v495 = vrsqrt.pop %v493
        %v496 = vmul.f32 %v480, %v494
        %v497 = vmul.f32 %v481, %v495
        %v498 = vld [vmem:[%s3] sm:$0x1]
        %v500 = vlaneseq
        %v501 = vshrl.u32 %v500, 7
        %v502 = vsub.s32 0, %v501
        %v503 = vrot.slane %v498, %v502
        %v505 = vmul.f32 %v496, %v503
        %v506 = vmul.f32 %v497, %v503
        %v507 = vld [vmem:[%s4] sm:$0x1]
        %v509 = vlaneseq
        %v510 = vshrl.u32 %v509, 7
        %v511 = vsub.s32 0, %v510
        %v512 = vrot.slane %v507, %v511
        %v514 = vadd.f32 %v505, %v512
        %v515 = vadd.f32 %v506, %v512
        %v516 = vpack.c.bf16 %v515, %v514
        %v517 = vld [vmem:[%s5] sm:$0xf]
        %v518 = vld [vmem:[%s5 + $0x4] sm:$0xf]
        %v519 = vld [vmem:[%s5 + $0x8] sm:$0xf]
        %v520 = vld [vmem:[%s5 + $0xc] sm:$0xf]
        %v525 = vunpack.c.l.b16 %v517
        %v526 = vunpack.c.l.b16 %v518
        %v527 = vunpack.c.l.b16 %v519
        %v528 = vunpack.c.l.b16 %v520
        %v529 = vpack.c.b16 %v526, %v525
        %v530 = vpack.c.b16 %v528, %v527
        %v534 = vsel %vm470, %v516, 0
        %536 = vmatprep.subr.bf16.mxu0 0
        %537 = vmatpush1.bf16.msra.mxu0 %v529
        %538 = vmatprep.subr.bf16.mxu0 0
        %539 = vmatpush1.bf16.msra.mxu0 %v530
        %540 = vmatprep.subr.bf16.mxu0 0
        %541 = vmatpush1.bf16.msra.mxu0 0
        %542 = vmatprep.subr.bf16.mxu0 0
        %543 = vmatpush1.bf16.msra.mxu0 0
        %544 = vmatprep.subr.bf16.mxu0 0
        %545 = vmatpush1.bf16.msra.mxu0 0
        %546 = vmatprep.subr.bf16.mxu0 0
        %547 = vmatpush1.bf16.msra.mxu0 0
        %548 = vmatprep.subr.bf16.mxu0 0
        %549 = vmatpush1.bf16.msra.mxu0 0
        %550 = vmatprep.subr.bf16.mxu0 0
        %551 = vmatpush1.bf16.msra.mxu0 0
        %552 = vmatprep.subr.bf16.mxu0 0
        %553 = vmatpush1.bf16.msra.mxu0 0
        %554 = vmatprep.subr.bf16.mxu0 0
        %555 = vmatpush1.bf16.msra.mxu0 0
        %556 = vmatprep.subr.bf16.mxu0 0
        %557 = vmatpush1.bf16.msra.mxu0 0
        %558 = vmatprep.subr.bf16.mxu0 0
        %559 = vmatpush1.bf16.msra.mxu0 0
        %560 = vmatprep.subr.bf16.mxu0 0
        %561 = vmatpush1.bf16.msra.mxu0 0
        %562 = vmatprep.subr.bf16.mxu0 0
        %563 = vmatpush1.bf16.msra.mxu0 0
        %564 = vmatprep.subr.bf16.mxu0 0
        %565 = vmatpush1.bf16.msra.mxu0 0
        %566 = vmatprep.subr.bf16.mxu0 0
        %567 = vmatpush1.bf16.msra.mxu0 0
        %568 = vmatprep.mubr.bf16.mxu0 0
        %569 = vmatmul.mubr.bf16.gmra.mrb[0].mxu0 %v534
        %v570 = vpop.f32.mrb[0].mxu0
        %v571 = vadd.f32 0.0, %v570
        %v572 = vpop.f32.mrb[0].mxu0
        %v573 = vpop.f32.mrb[0].mxu0
        %v574 = vadd.f32 0.0, %v573
        %v575 = vpop.f32.mrb[0].mxu0
        %576 = vdwg.mxu0
        %v577 = vpack.c.bf16 %v574, %v571
        %v579 = vunpack.c.l.b16 %v577
        %v580 = vunpack.c.h.b16 %v577
        %v581 = vpack.c.b16 %v579, %v579
        %v582 = vpack.c.b16 %v580, %v580
        %vm585 = vcmask 257024
        %586 = vst.msk [vmem:[%s329] sm:$0xf] %vm585, %v581
        %587 = vst.msk [vmem:[%s329 + $0x4] sm:$0xf] %vm585, %v582
        %v588 = vld [vmem:[%s6] sm:$0xf]
        %v589 = vld [vmem:[%s6 + $0x4] sm:$0xf]
        %v590 = vld [vmem:[%s6 + $0x8] sm:$0xf]
        %v591 = vld [vmem:[%s6 + $0xc] sm:$0xf]
        %v596 = vunpack.c.l.b16 %v588
        %v597 = vunpack.c.l.b16 %v589
        %v598 = vunpack.c.l.b16 %v590
        %v599 = vunpack.c.l.b16 %v591
        %v600 = vpack.c.b16 %v597, %v596
        %v601 = vpack.c.b16 %v599, %v598
        %604 = vmatprep.subr.bf16.mxu0 0
        %605 = vmatpush1.bf16.msra.mxu0 %v600
        %606 = vmatprep.subr.bf16.mxu0 0
        %607 = vmatpush1.bf16.msra.mxu0 %v601
        %608 = vmatprep.subr.bf16.mxu0 0
        %609 = vmatpush1.bf16.msra.mxu0 0
        %610 = vmatprep.subr.bf16.mxu0 0
        %611 = vmatpush1.bf16.msra.mxu0 0
        %612 = vmatprep.subr.bf16.mxu0 0
        %613 = vmatpush1.bf16.msra.mxu0 0
        %614 = vmatprep.subr.bf16.mxu0 0
        %615 = vmatpush1.bf16.msra.mxu0 0
        %616 = vmatprep.subr.bf16.mxu0 0
        %617 = vmatpush1.bf16.msra.mxu0 0
        %618 = vmatprep.subr.bf16.mxu0 0
        %619 = vmatpush1.bf16.msra.mxu0 0
        %620 = vmatprep.subr.bf16.mxu0 0
        %621 = vmatpush1.bf16.msra.mxu0 0
        %622 = vmatprep.subr.bf16.mxu0 0
        %623 = vmatpush1.bf16.msra.mxu0 0
        %624 = vmatprep.subr.bf16.mxu0 0
        %625 = vmatpush1.bf16.msra.mxu0 0
        %626 = vmatprep.subr.bf16.mxu0 0
        %627 = vmatpush1.bf16.msra.mxu0 0
        %628 = vmatprep.subr.bf16.mxu0 0
        %629 = vmatpush1.bf16.msra.mxu0 0
        %630 = vmatprep.subr.bf16.mxu0 0
        %631 = vmatpush1.bf16.msra.mxu0 0
        %632 = vmatprep.subr.bf16.mxu0 0
        %633 = vmatpush1.bf16.msra.mxu0 0
        %634 = vmatprep.subr.bf16.mxu0 0
        %635 = vmatpush1.bf16.msra.mxu0 0
        %636 = vmatprep.mubr.bf16.mxu0 0
        %637 = vmatmul.mubr.bf16.gmra.mrb[0].mxu0 %v534
        %v638 = vpop.f32.mrb[0].mxu0
        %v639 = vadd.f32 0.0, %v638
        %v640 = vpop.f32.mrb[0].mxu0
        %v641 = vpop.f32.mrb[0].mxu0
        %v642 = vadd.f32 0.0, %v641
        %v643 = vpop.f32.mrb[0].mxu0
        %644 = vdwg.mxu0
        %v645 = vpack.c.bf16 %v642, %v639
        %v647 = vunpack.c.l.b16 %v645
        %v648 = vunpack.c.h.b16 %v645
        %v649 = vpack.c.b16 %v647, %v647
        %v650 = vpack.c.b16 %v648, %v648
        %653 = vst.msk [vmem:[%s336] sm:$0xf] %vm585, %v649
        %654 = vst.msk [vmem:[%s336 + $0x4] sm:$0xf] %vm585, %v650
        %s655 = sand.u32 %s202, 1
        %s656 = scalar_lea.sflag [#allocation3], %s655
        %s657 = sand.u32 %s202, 1
        %s658 = smul.addr %s657, 8
        %s659 = scalar_lea.vmem [#allocation2], %s658
        %s660 = sand.u32 %s230, 1
        %s661 = scalar_lea.sflag [#allocation5], %s660
        %s662 = sand.u32 %s230, 1
        %s663 = smul.addr %s662, 8
        %s664 = scalar_lea.vmem [#allocation4], %s663
        // Predicated region
        $region49: #{tpu_custom_call.1} parent=47 // pred_check
          %p665 = pneg %p212
        $region50: #{tpu_custom_call.1} parent=47 // pred_check_branch
          %667 = sbr.rel (%p665) target = $region52
        $region51: #{tpu_custom_call.1} parent=47 // pred_region
          %s668 = smul.u32 2, %s31
          %s670 = ssub.s32 128, 128
          %671 = vsyncadd %s656, %s670
          %s672 = smul.addr %s30, 2
          %s673 = sadd.s32 %s668, %s672
          %s674 = smul.addr %s673, 64
          %s675 = scalar_lea.hbm %s7, %s674
          %s676 = sshll.u32 %s659, 4
          %s677 = int_to_ptr.vmem [resolvable:$true] %s676
          %682 = dma.vmem_to_hbm [thread:$0]  %s677, 128, %s675, %s656, 64, 64, 4
        $region52: #{tpu_custom_call.1} parent=47 // pred_fallthru
          _
        // Predicated region
        $region53: #{tpu_custom_call.1} parent=47 // pred_check
          %p683 = pneg %p240
        $region54: #{tpu_custom_call.1} parent=47 // pred_check_branch
          %685 = sbr.rel (%p683) target = $region56
        $region55: #{tpu_custom_call.1} parent=47 // pred_region
          %s686 = smul.u32 2, %s31
          %s688 = ssub.s32 128, 128
          %689 = vsyncadd %s661, %s688
          %s690 = smul.addr %s30, 2
          %s691 = sadd.s32 %s686, %s690
          %s692 = smul.addr %s691, 64
          %s693 = scalar_lea.hbm %s8, %s692
          %s694 = sshll.u32 %s664, 4
          %s695 = int_to_ptr.vmem [resolvable:$true] %s694
          %700 = dma.vmem_to_hbm [thread:$0]  %s695, 128, %s693, %s661, 64, 64, 4
        $region56: #{tpu_custom_call.1} parent=47 // pred_fallthru
          _
      $region48: #{tpu_custom_call.1} parent=5 // pred_fallthru
        _
      %p701 = scmp.le.s32.totalorder 2, %s21
      // Predicated region
      $region57: #{tpu_custom_call.1} parent=5 // pred_check
        %p702 = pneg %p701
      $region58: #{tpu_custom_call.1} parent=5 // pred_check_branch
        %704 = sbr.rel (%p702) target = $region60
      $region59: #{tpu_custom_call.1} parent=5 // pred_region
        %s705 = ssub.s32 %s21, 2
        // Predicated region
        $region61: #{tpu_custom_call.1} parent=59 // pred_check
          %p706 = pneg %p218
        $region62: #{tpu_custom_call.1} parent=59 // pred_check_branch
          %708 = sbr.rel (%p706) target = $region64
        $region63: #{tpu_custom_call.1} parent=59 // pred_region
          %s709 = sand.u32 %s203, 1
          %s710 = scalar_lea.sflag [#allocation3], %s709
          %s711 = sand.u32 %s203, 1
          %s712 = smul.addr %s711, 8
          %s713 = scalar_lea.vmem [#allocation2], %s712
          %714 = dma.done %s710, 128
        $region64: #{tpu_custom_call.1} parent=59 // pred_fallthru
          _
        // Predicated region
        $region65: #{tpu_custom_call.1} parent=59 // pred_check
          %p715 = pneg %p246
        $region66: #{tpu_custom_call.1} parent=59 // pred_check_branch
          %717 = sbr.rel (%p715) target = $region68
        $region67: #{tpu_custom_call.1} parent=59 // pred_region
          %s718 = sand.u32 %s231, 1
          %s719 = scalar_lea.sflag [#allocation5], %s718
          %s720 = sand.u32 %s231, 1
          %s721 = smul.addr %s720, 8
          %s722 = scalar_lea.vmem [#allocation4], %s721
          %723 = dma.done %s719, 128
        $region68: #{tpu_custom_call.1} parent=59 // pred_fallthru
          _
      $region60: #{tpu_custom_call.1} parent=5 // pred_fallthru
        _
    $region6: #{tpu_custom_call.1} parent=1 // loop_footer
      %s25 = sadd.s32 1, %s21
    $region7: #{tpu_custom_call.1} parent=1 // loop_footer_branch
      %20 = sbr.rel target = $region3
    $region8: #{tpu_custom_call.1} parent=1 // loop_exit
      _
    %724 = vsyncpa [#allocation3], 1
    %s725 = scalar_lea.sflag [#allocation3], 1
    %726 = vsyncpa %s725, 1
    %727 = vsyncpa [#allocation5], 1
    %s728 = scalar_lea.sflag [#allocation5], 1
    %729 = vsyncpa %s728, 1

</llo_original>
